<compile_context>
chip_gen: v6e
topology: v6e:2x2x1
jax: 0.10.0
libtpu: 0.0.40
codegen_flags: <defaults>
</compile_context>

<pallas_src>
import jax
import jax.numpy as jnp
from jax.experimental import pallas as pl
from jax.experimental.pallas import tpu as pltpu


def _round_up(x, m):
    return (x + m - 1) // m * m


def _fused_conv_kernel(taps_ref, w_ref, b_ref, o_ref):
    # taps_ref: (TM, Kp)   w_ref: (Kp, Np)   b_ref: (1, Np)   o_ref: (TM, Np)
    # Single MXU matmul over the fused 9*C contraction; f32 accumulate.
    acc = jnp.dot(taps_ref[...], w_ref[...], preferred_element_type=jnp.float32)
    # One fused bias-add + cast pass over the output tile (single store pass).
    o_ref[...] = (acc + b_ref[...]).astype(o_ref.dtype)


def downsample_conv2d(x_nchw, weight, bias, *, tm=512):
    """Conv2d(C, C, 3, stride=2, padding=1) with PyTorch NCHW semantics."""
    N, C, H, W = x_nchw.shape
    Cout, Cin, KH, KW = weight.shape
    assert (Cin, KH, KW) == (C, 3, 3) and Cout == C
    Ho = (H + 2 - 3) // 2 + 1
    Wo = (W + 2 - 3) // 2 + 1
    M = N * Ho * Wo

    # Activations drive the MXU input dtype; bias add stays in f32 on the
    # f32 accumulator so param precision is not silently degraded there.
    compute_dtype = x_nchw.dtype

    # --- glue: NCHW -> NHWC, pad=1, extract the 9 stride-2 taps -------------
    # Lane-dense layout: channels of all 9 taps concatenated on the last axis,
    # giving a contiguous (M, 9*C) slab (K index = (kh*3 + kw)*C + c).
    x = jnp.transpose(x_nchw, (0, 2, 3, 1))                        # (N, H, W, C)
    xp = jnp.pad(x, ((0, 0), (1, 1), (1, 1), (0, 0)))
    taps = jnp.concatenate(
        [xp[:, kh:kh + 2 * Ho:2, kw:kw + 2 * Wo:2, :]
         for kh in range(3) for kw in range(3)],
        axis=-1)                                                   # (N,Ho,Wo,9C)
    taps = taps.reshape(M, 9 * C).astype(compute_dtype)

    # weight (Cout, Cin, 3, 3) -> (9*Cin, Cout), matching the tap K ordering.
    w = jnp.transpose(weight, (2, 3, 1, 0)).reshape(9 * Cin, Cout)
    w = w.astype(compute_dtype)
    b = bias.reshape(1, Cout).astype(jnp.float32)

    # --- pad to lane/sublane-aligned shapes ---------------------------------
    K9 = 9 * C
    Kp = _round_up(K9, 128)        # lane-dense contraction dim
    Np = _round_up(Cout, 128)      # lane-dense output dim (unmasked stores)

    # Row tile: large tiles amortize per-grid-step overhead (~0.35 us); cap so
    # the double-buffered working set fits the scoped-VMEM default everywhere
    # (incl. v7x 64 MiB physical / 32 MiB default scoped).
    itemsize = jnp.dtype(compute_dtype).itemsize

    def _vmem_bytes(t):
        # 2x (double buffer) for taps, weight and output tiles + bias.
        return 2 * (t * Kp + Kp * Np + t * Np) * itemsize + 2 * Np * 4

    tm = max(8, min(tm, _round_up(M, 8)))
    while tm > 64 and _vmem_bytes(tm) > 24 * 1024 * 1024:
        tm //= 2
    tm = _round_up(tm, 8)
    Mp = _round_up(M, tm)

    taps = jnp.pad(taps, ((0, Mp - M), (0, Kp - K9)))
    w = jnp.pad(w, ((0, Kp - K9), (0, Np - Cout)))
    b = jnp.pad(b, ((0, 0), (0, Np - Cout)))

    out = pl.pallas_call(
        _fused_conv_kernel,
        out_shape=jax.ShapeDtypeStruct((Mp, Np), compute_dtype),
        grid_spec=pltpu.PrefetchScalarGridSpec(
            num_scalar_prefetch=0,
            grid=(Mp // tm,),
            in_specs=[
                pl.BlockSpec((tm, Kp), lambda i: (i, 0)),      # taps tile
                pl.BlockSpec((Kp, Np), lambda i: (0, 0)),      # full weight
                pl.BlockSpec((1, Np), lambda i: (0, 0)),       # bias (f32)
            ],
            out_specs=pl.BlockSpec((tm, Np), lambda i: (i, 0)),
        ),
        compiler_params=pltpu.CompilerParams(
            dimension_semantics=("parallel",),
            vmem_limit_bytes=32 * 1024 * 1024,
        ),
    )(taps, w, b)

    out = out[:M, :Cout].reshape(N, Ho, Wo, Cout)                  # NHWC
    return jnp.transpose(out, (0, 3, 1, 2))                        # NCHW


def _reference_conv(x_nchw, weight, bias):
    y = jax.lax.conv_general_dilated(
        x_nchw, weight, window_strides=(2, 2), padding=((1, 1), (1, 1)),
        dimension_numbers=("NCHW", "OIHW", "NCHW"))
    return y + bias[None, :, None, None]


if __name__ == "__main__":
    key = jax.random.PRNGKey(0)
    kx, kw, kb = jax.random.split(key, 3)

    N, C, H, W = 2, 4, 16, 16
    x = jax.random.normal(kx, (N, C, H, W), dtype=jnp.float32)

    # Deterministic parameter init (Conv2d(C, C, 3) shapes), kaiming-ish scale.
    fan_in = C * 3 * 3
    weight = jax.random.normal(kw, (C, C, 3, 3), dtype=jnp.float32) / jnp.sqrt(fan_in)
    bias = jax.random.normal(kb, (C,), dtype=jnp.float32) * 0.01

    out = downsample_conv2d(x, weight, bias)
    out = jax.block_until_ready(out)

    ref = jax.block_until_ready(_reference_conv(x, weight, bias))
    assert out.shape == (N, C, 8, 8), out.shape
    assert jnp.allclose(out, ref, atol=1e-5, rtol=1e-5), \
        float(jnp.max(jnp.abs(out - ref)))

    print("KERNEL_OK")
</pallas_src>

<mosaic_0001>
module attributes {stable_mosaic.version = 11 : i64} {
  func.func @_fused_conv_kernel(%arg0: i32, %arg1: memref<128x128xf32, #tpu.memory_space<vmem>>, %arg2: memref<128x128xf32, #tpu.memory_space<vmem>>, %arg3: memref<1x128xf32, #tpu.memory_space<vmem>>, %arg4: memref<128x128xf32, #tpu.memory_space<vmem>>) attributes {dimension_semantics = [#tpu.dimension_semantics<parallel>], iteration_bounds = array<i64: 1>, scalar_prefetch = 0 : i64, scratch_operands = 0 : i64, tpu.core_type = #tpu.core_type<tc>, window_params = [{transform_indices = @transform_0, window_bounds = array<i64: 128, 128>}, {pipeline_mode = #tpu.pipeline_mode<synchronous>, transform_indices = @transform_1, window_bounds = array<i64: 128, 128>}, {pipeline_mode = #tpu.pipeline_mode<synchronous>, transform_indices = @transform_2, window_bounds = array<i64: 1, 128>}, {transform_indices = @transform_3, window_bounds = array<i64: 128, 128>}]} {
    %c0 = arith.constant 0 : index
    %c0_0 = arith.constant 0 : index
    %0 = vector.load %arg1[%c0, %c0_0] : memref<128x128xf32, #tpu.memory_space<vmem>>, vector<128x128xf32>
    %c0_1 = arith.constant 0 : index
    %c0_2 = arith.constant 0 : index
    %1 = vector.load %arg2[%c0_1, %c0_2] : memref<128x128xf32, #tpu.memory_space<vmem>>, vector<128x128xf32>
    %cst = arith.constant dense<0.000000e+00> : vector<128x128xf32>
    %2 = tpu.matmul %0, %1, %cst {dimension_numbers = #tpu.dot_dimension_numbers<[1], [0], [0], [1], [0, 0, 1, 1], [], []>} : vector<128x128xf32>, vector<128x128xf32>, vector<128x128xf32> -> vector<128x128xf32>
    %c0_3 = arith.constant 0 : index
    %c0_4 = arith.constant 0 : index
    %3 = vector.load %arg3[%c0_3, %c0_4] : memref<1x128xf32, #tpu.memory_space<vmem>>, vector<1x128xf32>
    %4 = vector.broadcast %3 : vector<1x128xf32> to vector<128x128xf32>
    %5 = arith.addf %2, %4 : vector<128x128xf32>
    %c0_5 = arith.constant 0 : index
    %c0_6 = arith.constant 0 : index
    %6 = vector.load %arg4[%c0_5, %c0_6] : memref<128x128xf32, #tpu.memory_space<vmem>>, vector<128x128xf32>
    tpu.vector_store %arg4[%c0_5, %c0_6], %5 {strides = array<i32>} : memref<128x128xf32, #tpu.memory_space<vmem>>, vector<128x128xf32>,
    return
  }
  func.func @transform_0(%arg0: i32) -> (i32, i32) {
    %c0_i32 = arith.constant 0 : i32
    %c0_i32_0 = arith.constant 0 : i32
    return %arg0, %c0_i32 : i32, i32
  }
  func.func @transform_1(%arg0: i32) -> (i32, i32) {
    %c0_i32 = arith.constant 0 : i32
    %c0_i32_0 = arith.constant 0 : i32
    %c0_i32_1 = arith.constant 0 : i32
    return %c0_i32, %c0_i32_0 : i32, i32
  }
  func.func @transform_2(%arg0: i32) -> (i32, i32) {
    %c0_i32 = arith.constant 0 : i32
    %c0_i32_0 = arith.constant 0 : i32
    %c0_i32_1 = arith.constant 0 : i32
    return %c0_i32, %c0_i32_0 : i32, i32
  }
  func.func @transform_3(%arg0: i32) -> (i32, i32) {
    %c0_i32 = arith.constant 0 : i32
    %c0_i32_0 = arith.constant 0 : i32
    return %arg0, %c0_i32 : i32, i32
  }
}

</mosaic_0001>

<llo_original>
// kernel: tpu_custom_call.1
$region0: #{tpu_custom_call.1}
  #allocation0 [shape = 'u32[]', space=smem, size = 0x4, offset = 0x4, fixed_abs, tag = 'smem constant byte address 0x4 - core index']
  #allocation1 [shape = 'u32[144,128]{1,0:T(1,128)}', space=vmem, size = 0x12000, scoped, tag = 'internal scratch']
  %s0 = inlined_call_operand.hbm [shape: f32[128,128], index: 0, kind: input, shape index: {}]
  %s1 = inlined_call_operand.hbm [shape: f32[128,128], index: 1, kind: input, shape index: {}]
  %s2 = inlined_call_operand.vmem [shape: f32[1,128], index: 2, kind: input, shape index: {}]
  %s3 = inlined_call_operand.hbm [shape: f32[128,128], index: 3, kind: output, shape index: {}]
  %s4 = sld [smem:[#allocation0]]
  $region30: #{tpu_custom_call.1} parent=0
    _
  %s6 = ssub.s32 1, %s4
  %s7 = scalar_select 0, %s6, %s4
  $region1: #{tpu_custom_call.1} parent=0
    #allocation2 [shape = 'u8[65536]{0}', space=vmem, size = 0x10000, scoped, tag = 'input window, operand 0, single buffered']
    #allocation3 [shape = 's32[1]{0}', space=sflag, size = 0x4, scoped, tag = 'scoped memory for tpu_custom_call.1']
    #allocation4 [shape = 's32[1]{0}', space=sflag, size = 0x4, scoped, tag = 'scoped memory for tpu_custom_call.1']
    #allocation5 [shape = 'u8[65536]{0}', space=vmem, size = 0x10000, scoped, tag = 'input window, operand 1, single buffered']
    #allocation6 [shape = 's32[1]{0}', space=sflag, size = 0x4, scoped, tag = 'scoped memory for tpu_custom_call.1']
    #allocation7 [shape = 'u8[65536]{0}', space=vmem, size = 0x10000, scoped, tag = 'output window, operand 0, single buffered']
    %8 = vsyncpa [#allocation3], 0
    %9 = vsyncpa [#allocation6], 0
    %10 = vsyncpa [#allocation4], 0
    // Predicated region
    $region2: #{tpu_custom_call.1} parent=1 // pred_check
      _
    $region3: #{tpu_custom_call.1} parent=1 // pred_check_branch
      %12 = sbr.rel (0) target = $region5
    $region4: #{tpu_custom_call.1} parent=1 // pred_region
      %s14 = ssub.s32 2048, 2048
      %15 = vsyncadd [#allocation3], %s14
      %s16 = sshll.u32 [#allocation2], 4
      %s17 = int_to_ptr.vmem [resolvable:$true] %s16
      %22 = dma.hbm_to_vmem [thread:$0]  %s0, 2048, %s17, [#allocation3], 128, 128, 8
    $region5: #{tpu_custom_call.1} parent=1 // pred_fallthru
      _
    // Predicated region
    $region6: #{tpu_custom_call.1} parent=1 // pred_check
      _
    $region7: #{tpu_custom_call.1} parent=1 // pred_check_branch
      %24 = sbr.rel (0) target = $region9
    $region8: #{tpu_custom_call.1} parent=1 // pred_region
      %s26 = ssub.s32 2048, 2048
      %27 = vsyncadd [#allocation6], %s26
      %s28 = sshll.u32 [#allocation5], 4
      %s29 = int_to_ptr.vmem [resolvable:$true] %s28
      %34 = dma.hbm_to_vmem [thread:$0]  %s1, 2048, %s29, [#allocation6], 128, 128, 8
    $region9: #{tpu_custom_call.1} parent=1 // pred_fallthru
      _
    // Predicated region
    $region10: #{tpu_custom_call.1} parent=1 // pred_check
      _
    $region11: #{tpu_custom_call.1} parent=1 // pred_check_branch
      %36 = sbr.rel (0) target = $region13
    $region12: #{tpu_custom_call.1} parent=1 // pred_region
      _
    $region13: #{tpu_custom_call.1} parent=1 // pred_fallthru
      _
    // Predicated region
    $region14: #{tpu_custom_call.1} parent=1 // pred_check
      _
    $region15: #{tpu_custom_call.1} parent=1 // pred_check_branch
      %38 = sbr.rel (0) target = $region17
    $region16: #{tpu_custom_call.1} parent=1 // pred_region
      %39 = dma.done [#allocation3], 2048
    $region17: #{tpu_custom_call.1} parent=1 // pred_fallthru
      _
    // Predicated region
    $region18: #{tpu_custom_call.1} parent=1 // pred_check
      _
    $region19: #{tpu_custom_call.1} parent=1 // pred_check_branch
      %41 = sbr.rel (0) target = $region21
    $region20: #{tpu_custom_call.1} parent=1 // pred_region
      %42 = dma.done [#allocation6], 2048
    $region21: #{tpu_custom_call.1} parent=1 // pred_fallthru
      _
    %v43 = vld [vmem:[#allocation2] sm:$0xff]
    %v44 = vld [vmem:[#allocation2 + $0x8] sm:$0xff]
    %v45 = vld [vmem:[#allocation2 + $0x10] sm:$0xff]
    %v46 = vld [vmem:[#allocation2 + $0x18] sm:$0xff]
    %v47 = vld [vmem:[#allocation2 + $0x20] sm:$0xff]
    %v48 = vld [vmem:[#allocation2 + $0x28] sm:$0xff]
    %v49 = vld [vmem:[#allocation2 + $0x30] sm:$0xff]
    %v50 = vld [vmem:[#allocation2 + $0x38] sm:$0xff]
    %v51 = vld [vmem:[#allocation2 + $0x40] sm:$0xff]
    %v52 = vld [vmem:[#allocation2 + $0x48] sm:$0xff]
    %v53 = vld [vmem:[#allocation2 + $0x50] sm:$0xff]
    %v54 = vld [vmem:[#allocation2 + $0x58] sm:$0xff]
    %v55 = vld [vmem:[#allocation2 + $0x60] sm:$0xff]
    %v56 = vld [vmem:[#allocation2 + $0x68] sm:$0xff]
    %v57 = vld [vmem:[#allocation2 + $0x70] sm:$0xff]
    %v58 = vld [vmem:[#allocation2 + $0x78] sm:$0xff]
    %v59 = vld [vmem:[#allocation5] sm:$0xff]
    %v60 = vld [vmem:[#allocation5 + $0x8] sm:$0xff]
    %v61 = vld [vmem:[#allocation5 + $0x10] sm:$0xff]
    %v62 = vld [vmem:[#allocation5 + $0x18] sm:$0xff]
    %v63 = vld [vmem:[#allocation5 + $0x20] sm:$0xff]
    %v64 = vld [vmem:[#allocation5 + $0x28] sm:$0xff]
    %v65 = vld [vmem:[#allocation5 + $0x30] sm:$0xff]
    %v66 = vld [vmem:[#allocation5 + $0x38] sm:$0xff]
    %v67 = vld [vmem:[#allocation5 + $0x40] sm:$0xff]
    %v68 = vld [vmem:[#allocation5 + $0x48] sm:$0xff]
    %v69 = vld [vmem:[#allocation5 + $0x50] sm:$0xff]
    %v70 = vld [vmem:[#allocation5 + $0x58] sm:$0xff]
    %v71 = vld [vmem:[#allocation5 + $0x60] sm:$0xff]
    %v72 = vld [vmem:[#allocation5 + $0x68] sm:$0xff]
    %v73 = vld [vmem:[#allocation5 + $0x70] sm:$0xff]
    %v74 = vld [vmem:[#allocation5 + $0x78] sm:$0xff]
    %v75 = vld [vmem:[%s2] sm:$0x1]
    %v77 = vlaneseq
    %v78 = vshrl.u32 %v77, 7
    %v79 = vsub.s32 0, %v78
    %v80 = vrot.slane %v75, %v79
    %82 = vmatprep.subr.mxu0 0.0
    %83 = vmatpush1.msra.mxu0 %v74
    %84 = vmatprep.subr.mxu0 0.0
    %85 = vmatpush1.msra.mxu0 %v73
    %86 = vmatprep.subr.mxu0 0.0
    %87 = vmatpush1.msra.mxu0 %v72
    %88 = vmatprep.subr.mxu0 0.0
    %89 = vmatpush1.msra.mxu0 %v71
    %90 = vmatprep.subr.mxu0 0.0
    %91 = vmatpush1.msra.mxu0 %v70
    %92 = vmatprep.subr.mxu0 0.0
    %93 = vmatpush1.msra.mxu0 %v69
    %94 = vmatprep.subr.mxu0 0.0
    %95 = vmatpush1.msra.mxu0 %v68
    %96 = vmatprep.subr.mxu0 0.0
    %97 = vmatpush1.msra.mxu0 %v67
    %98 = vmatprep.subr.mxu0 0.0
    %99 = vmatpush1.msra.mxu0 %v66
    %100 = vmatprep.subr.mxu0 0.0
    %101 = vmatpush1.msra.mxu0 %v65
    %102 = vmatprep.subr.mxu0 0.0
    %103 = vmatpush1.msra.mxu0 %v64
    %104 = vmatprep.subr.mxu0 0.0
    %105 = vmatpush1.msra.mxu0 %v63
    %106 = vmatprep.subr.mxu0 0.0
    %107 = vmatpush1.msra.mxu0 %v62
    %108 = vmatprep.subr.mxu0 0.0
    %109 = vmatpush1.msra.mxu0 %v61
    %110 = vmatprep.subr.mxu0 0.0
    %111 = vmatpush1.msra.mxu0 %v60
    %112 = vmatprep.subr.mxu0 0.0
    %113 = vmatpush1.msra.mxu0 %v59
    %114 = vmatprep.subr.mxu0 0.0
    %115 = vmatpush2.msra.mxu0 0.0
    %116 = vmatprep.subr.mxu0 0.0
    %117 = vmatpush2.msra.mxu0 0.0
    %118 = vmatprep.subr.mxu0 0.0
    %119 = vmatpush2.msra.mxu0 0.0
    %120 = vmatprep.subr.mxu0 0.0
    %121 = vmatpush2.msra.mxu0 0.0
    %122 = vmatprep.subr.mxu0 0.0
    %123 = vmatpush2.msra.mxu0 0.0
    %124 = vmatprep.subr.mxu0 0.0
    %125 = vmatpush2.msra.mxu0 0.0
    %126 = vmatprep.subr.mxu0 0.0
    %127 = vmatpush2.msra.mxu0 0.0
    %128 = vmatprep.subr.mxu0 0.0
    %129 = vmatpush2.msra.mxu0 0.0
    %130 = vmatprep.subr.mxu0 0.0
    %131 = vmatpush2.msra.mxu0 0.0
    %132 = vmatprep.subr.mxu0 0.0
    %133 = vmatpush2.msra.mxu0 0.0
    %134 = vmatprep.subr.mxu0 0.0
    %135 = vmatpush2.msra.mxu0 0.0
    %136 = vmatprep.subr.mxu0 0.0
    %137 = vmatpush2.msra.mxu0 0.0
    %138 = vmatprep.subr.mxu0 0.0
    %139 = vmatpush2.msra.mxu0 0.0
    %140 = vmatprep.subr.mxu0 0.0
    %141 = vmatpush2.msra.mxu0 0.0
    %142 = vmatprep.subr.mxu0 0.0
    %143 = vmatpush2.msra.mxu0 0.0
    %144 = vmatprep.subr.mxu0 0.0
    %145 = vmatpush2.msra.mxu0 0.0
    %146 = vmatprep.mubr.f32.mxu0 0.0
    %147 = vmatmul.mubr.f32.gmra.mxu0 %v43
    %v148 = vpop.f32.mrf.mxu0
    %v149 = vadd.f32 %v80, %v148
    %v150 = vpop.f32.mrf.mxu0
    %151 = vmatprep.mubr.f32.mxu0 0.0
    %152 = vmatmul.mubr.f32.gmra.mxu0 %v44
    %v153 = vpop.f32.mrf.mxu0
    %v154 = vadd.f32 %v80, %v153
    %v155 = vpop.f32.mrf.mxu0
    %156 = vmatprep.mubr.f32.mxu0 0.0
    %157 = vmatmul.mubr.f32.gmra.mxu0 %v45
    %v158 = vpop.f32.mrf.mxu0
    %v159 = vadd.f32 %v80, %v158
    %v160 = vpop.f32.mrf.mxu0
    %161 = vmatprep.mubr.f32.mxu0 0.0
    %162 = vmatmul.mubr.f32.gmra.mxu0 %v46
    %v163 = vpop.f32.mrf.mxu0
    %v164 = vadd.f32 %v80, %v163
    %v165 = vpop.f32.mrf.mxu0
    %166 = vmatprep.mubr.f32.mxu0 0.0
    %167 = vmatmul.mubr.f32.gmra.mxu0 %v47
    %v168 = vpop.f32.mrf.mxu0
    %v169 = vadd.f32 %v80, %v168
    %v170 = vpop.f32.mrf.mxu0
    %171 = vmatprep.mubr.f32.mxu0 0.0
    %172 = vmatmul.mubr.f32.gmra.mxu0 %v48
    %v173 = vpop.f32.mrf.mxu0
    %v174 = vadd.f32 %v80, %v173
    %v175 = vpop.f32.mrf.mxu0
    %176 = vmatprep.mubr.f32.mxu0 0.0
    %177 = vmatmul.mubr.f32.gmra.mxu0 %v49
    %v178 = vpop.f32.mrf.mxu0
    %v179 = vadd.f32 %v80, %v178
    %v180 = vpop.f32.mrf.mxu0
    %181 = vmatprep.mubr.f32.mxu0 0.0
    %182 = vmatmul.mubr.f32.gmra.mxu0 %v50
    %v183 = vpop.f32.mrf.mxu0
    %v184 = vadd.f32 %v80, %v183
    %v185 = vpop.f32.mrf.mxu0
    %186 = vmatprep.mubr.f32.mxu0 0.0
    %187 = vmatmul.mubr.f32.gmra.mxu0 %v51
    %v188 = vpop.f32.mrf.mxu0
    %v189 = vadd.f32 %v80, %v188
    %v190 = vpop.f32.mrf.mxu0
    %191 = vmatprep.mubr.f32.mxu0 0.0
    %192 = vmatmul.mubr.f32.gmra.mxu0 %v52
    %v193 = vpop.f32.mrf.mxu0
    %v194 = vadd.f32 %v80, %v193
    %v195 = vpop.f32.mrf.mxu0
    %196 = vmatprep.mubr.f32.mxu0 0.0
    %197 = vmatmul.mubr.f32.gmra.mxu0 %v53
    %v198 = vpop.f32.mrf.mxu0
    %v199 = vadd.f32 %v80, %v198
    %v200 = vpop.f32.mrf.mxu0
    %201 = vmatprep.mubr.f32.mxu0 0.0
    %202 = vmatmul.mubr.f32.gmra.mxu0 %v54
    %v203 = vpop.f32.mrf.mxu0
    %v204 = vadd.f32 %v80, %v203
    %v205 = vpop.f32.mrf.mxu0
    %206 = vmatprep.mubr.f32.mxu0 0.0
    %207 = vmatmul.mubr.f32.gmra.mxu0 %v55
    %v208 = vpop.f32.mrf.mxu0
    %v209 = vadd.f32 %v80, %v208
    %v210 = vpop.f32.mrf.mxu0
    %211 = vmatprep.mubr.f32.mxu0 0.0
    %212 = vmatmul.mubr.f32.gmra.mxu0 %v56
    %v213 = vpop.f32.mrf.mxu0
    %v214 = vadd.f32 %v80, %v213
    %v215 = vpop.f32.mrf.mxu0
    %216 = vmatprep.mubr.f32.mxu0 0.0
    %217 = vmatmul.mubr.f32.gmra.mxu0 %v57
    %v218 = vpop.f32.mrf.mxu0
    %v219 = vadd.f32 %v80, %v218
    %v220 = vpop.f32.mrf.mxu0
    %221 = vmatprep.mubr.f32.mxu0 0.0
    %222 = vmatmul.mubr.f32.gmra.mxu0 %v58
    %v223 = vpop.f32.mrf.mxu0
    %v224 = vadd.f32 %v80, %v223
    %v225 = vpop.f32.mrf.mxu0
    %226 = vdwg.mxu0
    %227 = vst [vmem:[#allocation7] sm:$0xff] %v149
    %228 = vst [vmem:[#allocation7 + $0x8] sm:$0xff] %v154
    %229 = vst [vmem:[#allocation7 + $0x10] sm:$0xff] %v159
    %230 = vst [vmem:[#allocation7 + $0x18] sm:$0xff] %v164
    %231 = vst [vmem:[#allocation7 + $0x20] sm:$0xff] %v169
    %232 = vst [vmem:[#allocation7 + $0x28] sm:$0xff] %v174
    %233 = vst [vmem:[#allocation7 + $0x30] sm:$0xff] %v179
    %234 = vst [vmem:[#allocation7 + $0x38] sm:$0xff] %v184
    %235 = vst [vmem:[#allocation7 + $0x40] sm:$0xff] %v189
    %236 = vst [vmem:[#allocation7 + $0x48] sm:$0xff] %v194
    %237 = vst [vmem:[#allocation7 + $0x50] sm:$0xff] %v199
    %238 = vst [vmem:[#allocation7 + $0x58] sm:$0xff] %v204
    %239 = vst [vmem:[#allocation7 + $0x60] sm:$0xff] %v209
    %240 = vst [vmem:[#allocation7 + $0x68] sm:$0xff] %v214
    %241 = vst [vmem:[#allocation7 + $0x70] sm:$0xff] %v219
    %242 = vst [vmem:[#allocation7 + $0x78] sm:$0xff] %v224
    // Predicated region
    $region22: #{tpu_custom_call.1} parent=1 // pred_check
      _
    $region23: #{tpu_custom_call.1} parent=1 // pred_check_branch
      %244 = sbr.rel (0) target = $region25
    $region24: #{tpu_custom_call.1} parent=1 // pred_region
      %s246 = ssub.s32 2048, 2048
      %247 = vsyncadd [#allocation4], %s246
      %s248 = sshll.u32 [#allocation7], 4
      %s249 = int_to_ptr.vmem [resolvable:$true] %s248
      %254 = dma.vmem_to_hbm [thread:$0]  %s249, 2048, %s3, [#allocation4], 128, 128, 8
    $region25: #{tpu_custom_call.1} parent=1 // pred_fallthru
      _
    // Predicated region
    $region26: #{tpu_custom_call.1} parent=1 // pred_check
      _
    $region27: #{tpu_custom_call.1} parent=1 // pred_check_branch
      %256 = sbr.rel (0) target = $region29
    $region28: #{tpu_custom_call.1} parent=1 // pred_region
      %257 = dma.done [#allocation4], 2048
    $region29: #{tpu_custom_call.1} parent=1 // pred_fallthru
      _
    %258 = vsyncpa [#allocation3], 1
    %259 = vsyncpa [#allocation6], 1
    %260 = vsyncpa [#allocation4], 1

</llo_original>
